<compile_context>
chip_gen: v7x
topology: tpu7x:2x2x1
jax: 0.10.0
libtpu: 0.0.40
codegen_flags: <defaults>
</compile_context>

<pallas_src>
import functools
import math

import jax
import jax.numpy as jnp
from jax import lax
from jax.experimental import pallas as pl
from jax.experimental.pallas import tpu as pltpu

# Tile sizes (auto-clamped for small shapes).
TM, TN, TK = 512, 512, 512
LN_TM = 512
ATTN_TS = 256
SINGLE_K_MAX = 1024                     # K <= this -> full-K block, no accumulator
VMEM_LIMIT = 48 * 1024 * 1024           # fits v7x's 64 MiB physical VMEM; fine on v5e/v6e
NEG = -1e9


# ----------------------------- shape helpers -----------------------------

def _round_up(x, m):
    return ((x + m - 1) // m) * m


def _fit(dim, desired, align):
    """Return (padded_dim, tile) with tile dividing padded_dim and tile % align == 0
    (or tile == padded_dim when dim <= desired)."""
    if dim <= desired:
        p = _round_up(dim, align)
        return p, p
    p = _round_up(dim, align)
    t = desired
    while p % t != 0:
        t -= align
    return p, t


def _seq_fit(S, desired=ATTN_TS):
    """Sequence-length padding/tiling for attention.  Small S: pad to sublane (8) and
    use the full dim as the block (legal: block == array dim); large S: 128-aligned."""
    if S <= desired:
        p = _round_up(S, 8)
        return p, p
    return _fit(S, desired, 128)


def _pad2d(a, rows, cols, value=0.0):
    pr, pc = rows - a.shape[0], cols - a.shape[1]
    if pr == 0 and pc == 0:
        return a
    return jnp.pad(a, ((0, pr), (0, pc)), constant_values=value)


def _pad_rows(x, Mp):
    return x if x.shape[0] == Mp else jnp.pad(x, ((0, Mp - x.shape[0]), (0, 0)))


def _ln(y, g, be, true_n, n_pad, eps):
    """LayerNorm over the last axis where the last `n_pad` columns of y are exactly 0.
    Uses the (x - mu)^2 form with an exact correction for the zero pad columns."""
    inv_n = 1.0 / float(true_n)
    mu = jnp.sum(y, axis=-1, keepdims=True) * inv_n
    d = y - mu
    var = (jnp.sum(d * d, axis=-1, keepdims=True) - float(n_pad) * mu * mu) * inv_n
    return d * lax.rsqrt(var + eps) * g + be


# ----------------------------- tiled dense (+ optional GELU) -----------------------------

def _matmul_single_kernel(x_ref, w_ref, b_ref, o_ref, *, activation):
    y = jnp.dot(x_ref[...], w_ref[...], preferred_element_type=jnp.float32) + b_ref[...]
    if activation == "gelu":
        # TODO(synk): HF RoBERTa uses erf-GELU; tanh approximation is EUP-friendly.
        y = jax.nn.gelu(y, approximate=True)
    o_ref[...] = y.astype(o_ref.dtype)


def _matmul_tiled_kernel(x_ref, w_ref, b_ref, o_ref, acc_ref, *, activation):
    @pl.when(pl.program_id(2) == 0)
    def _():
        acc_ref[...] = jnp.zeros_like(acc_ref)

    acc_ref[...] += jnp.dot(x_ref[...], w_ref[...], preferred_element_type=jnp.float32)

    @pl.when(pl.program_id(2) == pl.num_programs(2) - 1)
    def _():
        y = acc_ref[...] + b_ref[...]
        if activation == "gelu":
            y = jax.nn.gelu(y, approximate=True)
        o_ref[...] = y.astype(o_ref.dtype)


def dense(x, w, b, activation=None, out_dtype=jnp.bfloat16, *, tm=TM, tn=TN, tk=TK):
    """y = act(x @ w + b).  `w` is pre-padded bf16 (K, N), `b` is f32 (1, N).
    x is bf16 with matching K; only the M dim is padded here (to a multiple of 8)."""
    M, K = x.shape
    N = w.shape[1]
    if x.dtype != jnp.bfloat16:
        x = x.astype(jnp.bfloat16)
    Mp, tm_ = _fit(M, tm, 8)
    _, tn_ = _fit(N, tn, 128)
    xp = _pad_rows(x, Mp)

    if K <= SINGLE_K_MAX:
        out = pl.pallas_call(
            functools.partial(_matmul_single_kernel, activation=activation),
            out_shape=jax.ShapeDtypeStruct((Mp, N), out_dtype),
            grid=(Mp // tm_, N // tn_),
            in_specs=[pl.BlockSpec((tm_, K), lambda i, j: (i, 0)),
                      pl.BlockSpec((K, tn_), lambda i, j: (0, j)),
                      pl.BlockSpec((1, tn_), lambda i, j: (0, j))],
            out_specs=pl.BlockSpec((tm_, tn_), lambda i, j: (i, j)),
            compiler_params=pltpu.CompilerParams(
                dimension_semantics=("parallel", "parallel"),
                vmem_limit_bytes=VMEM_LIMIT),
        )(xp, w, b)
    else:
        _, tk_ = _fit(K, tk, 128)
        out = pl.pallas_call(
            functools.partial(_matmul_tiled_kernel, activation=activation),
            out_shape=jax.ShapeDtypeStruct((Mp, N), out_dtype),
            grid=(Mp // tm_, N // tn_, K // tk_),
            in_specs=[pl.BlockSpec((tm_, tk_), lambda i, j, k: (i, k)),
                      pl.BlockSpec((tk_, tn_), lambda i, j, k: (k, j)),
                      pl.BlockSpec((1, tn_), lambda i, j, k: (0, j))],
            out_specs=pl.BlockSpec((tm_, tn_), lambda i, j, k: (i, j)),
            scratch_shapes=[pltpu.VMEM((tm_, tn_), jnp.float32)],
            compiler_params=pltpu.CompilerParams(
                dimension_semantics=("parallel", "parallel", "arbitrary"),
                vmem_limit_bytes=VMEM_LIMIT),
        )(xp, w, b)
    return out[:M] if Mp != M else out


# ----------------------------- dense + residual + LayerNorm (fused epilogue) -----------------------------

def _matmul_res_ln_single_kernel(x_ref, w_ref, b_ref, r_ref, g_ref, be_ref, o_ref,
                                 *, true_n, n_pad, eps):
    y = (jnp.dot(x_ref[...], w_ref[...], preferred_element_type=jnp.float32)
         + b_ref[...] + r_ref[...].astype(jnp.float32))
    o_ref[...] = _ln(y, g_ref[...], be_ref[...], true_n, n_pad, eps).astype(o_ref.dtype)


def _matmul_res_ln_tiled_kernel(x_ref, w_ref, b_ref, r_ref, g_ref, be_ref, o_ref, acc_ref,
                                *, true_n, n_pad, eps):
    @pl.when(pl.program_id(1) == 0)
    def _():
        acc_ref[...] = jnp.zeros_like(acc_ref)

    acc_ref[...] += jnp.dot(x_ref[...], w_ref[...], preferred_element_type=jnp.float32)

    @pl.when(pl.program_id(1) == pl.num_programs(1) - 1)
    def _():
        y = acc_ref[...] + b_ref[...] + r_ref[...].astype(jnp.float32)
        o_ref[...] = _ln(y, g_ref[...], be_ref[...], true_n, n_pad, eps).astype(o_ref.dtype)


def dense_res_ln(x, w, b, residual, gamma, beta, true_n, *, tm=TM, tk=TK, eps=1e-5):
    """LayerNorm((x @ w + b) + residual); residual-add + LN fused into the matmul
    epilogue.  The feature dim N stays whole so row statistics are block-local."""
    M, K = x.shape
    N = w.shape[1]
    if x.dtype != jnp.bfloat16:
        x = x.astype(jnp.bfloat16)
    if residual.dtype != jnp.bfloat16:
        residual = residual.astype(jnp.bfloat16)
    Mp, tm_ = _fit(M, tm, 8)
    xp = _pad_rows(x, Mp)
    rp = _pad_rows(residual, Mp)
    n_pad = N - true_n

    if K <= SINGLE_K_MAX:
        out = pl.pallas_call(
            functools.partial(_matmul_res_ln_single_kernel,
                              true_n=true_n, n_pad=n_pad, eps=eps),
            out_shape=jax.ShapeDtypeStruct((Mp, N), jnp.bfloat16),
            grid=(Mp // tm_,),
            in_specs=[pl.BlockSpec((tm_, K), lambda i: (i, 0)),
                      pl.BlockSpec((K, N), lambda i: (0, 0)),
                      pl.BlockSpec((1, N), lambda i: (0, 0)),
                      pl.BlockSpec((tm_, N), lambda i: (i, 0)),
                      pl.BlockSpec((1, N), lambda i: (0, 0)),
                      pl.BlockSpec((1, N), lambda i: (0, 0))],
            out_specs=pl.BlockSpec((tm_, N), lambda i: (i, 0)),
            compiler_params=pltpu.CompilerParams(
                dimension_semantics=("parallel",),
                vmem_limit_bytes=VMEM_LIMIT),
        )(xp, w, b, rp, gamma, beta)
    else:
        _, tk_ = _fit(K, tk, 128)
        out = pl.pallas_call(
            functools.partial(_matmul_res_ln_tiled_kernel,
                              true_n=true_n, n_pad=n_pad, eps=eps),
            out_shape=jax.ShapeDtypeStruct((Mp, N), jnp.bfloat16),
            grid=(Mp // tm_, K // tk_),
            in_specs=[pl.BlockSpec((tm_, tk_), lambda i, k: (i, k)),
                      pl.BlockSpec((tk_, N), lambda i, k: (k, 0)),
                      pl.BlockSpec((1, N), lambda i, k: (0, 0)),
                      pl.BlockSpec((tm_, N), lambda i, k: (i, 0)),
                      pl.BlockSpec((1, N), lambda i, k: (0, 0)),
                      pl.BlockSpec((1, N), lambda i, k: (0, 0))],
            out_specs=pl.BlockSpec((tm_, N), lambda i, k: (i, 0)),
            scratch_shapes=[pltpu.VMEM((tm_, N), jnp.float32)],
            compiler_params=pltpu.CompilerParams(
                dimension_semantics=("parallel", "arbitrary"),
                vmem_limit_bytes=VMEM_LIMIT),
        )(xp, w, b, rp, gamma, beta)
    return out[:M] if Mp != M else out


# ----------------------------- standalone LayerNorm (embeddings) -----------------------------

def _layernorm_kernel(x_ref, g_ref, b_ref, o_ref, *, true_n, n_pad, eps):
    x = x_ref[...].astype(jnp.float32)
    o_ref[...] = _ln(x, g_ref[...], b_ref[...], true_n, n_pad, eps).astype(o_ref.dtype)


def layernorm(x, g, b, true_n, *, eps=1e-5, tm=LN_TM):
    M, Np = x.shape
    Mp, tm_ = _fit(M, tm, 8)
    xp = _pad_rows(x, Mp)
    out = pl.pallas_call(
        functools.partial(_layernorm_kernel, true_n=true_n, n_pad=Np - true_n, eps=eps),
        out_shape=jax.ShapeDtypeStruct((Mp, Np), jnp.bfloat16),
        grid=(Mp // tm_,),
        in_specs=[pl.BlockSpec((tm_, Np), lambda i: (i, 0)),
                  pl.BlockSpec((1, Np), lambda i: (0, 0)),
                  pl.BlockSpec((1, Np), lambda i: (0, 0))],
        out_specs=pl.BlockSpec((tm_, Np), lambda i: (i, 0)),
        compiler_params=pltpu.CompilerParams(
            dimension_semantics=("parallel",),
            vmem_limit_bytes=VMEM_LIMIT),
    )(xp, g, b)
    return out[:M] if Mp != M else out


# ----------------------------- flash-style attention -----------------------------

def _flash_attn_kernel(q_ref, k_ref, v_ref, bias_ref, o_ref, m_ref, l_ref, acc_ref):
    kv = pl.program_id(2)

    @pl.when(kv == 0)
    def _():
        m_ref[...] = jnp.full(m_ref.shape, -1e30, jnp.float32)
        l_ref[...] = jnp.zeros_like(l_ref)
        acc_ref[...] = jnp.zeros_like(acc_ref)

    q = q_ref[0]                        # (tq, dh) bf16 (scale folded into w_q/b_q)
    k = k_ref[0]
    v = v_ref[0]
    # Contract on dim 1 of both operands -> no materialized K-tile transpose.
    s = lax.dot_general(q, k, (((1,), (1,)), ((), ())),
                        preferred_element_type=jnp.float32) + bias_ref[0]

    m_prev = m_ref[...]
    m_new = jnp.maximum(m_prev, jnp.max(s, axis=-1, keepdims=True))
    alpha = jnp.exp(m_prev - m_new)
    p = jnp.exp(s - m_new)
    l_ref[...] = alpha * l_ref[...] + jnp.sum(p, axis=-1, keepdims=True)
    acc_ref[...] = alpha * acc_ref[...] + jnp.dot(p.astype(v.dtype), v,
                                                  preferred_element_type=jnp.float32)
    m_ref[...] = m_new

    @pl.when(kv == pl.num_programs(2) - 1)
    def _():
        o_ref[...] = (acc_ref[...] * pl.reciprocal(l_ref[...], approx=True)
                      ).astype(o_ref.dtype)[None]


def attention(q, k, v, bias, *, Sp, ts):
    """q,k,v: (B*nH, S, dh) bf16 (dh compact); bias: (B, 1, Sp) f32 key mask bias.
    Returns (B*nH, S, dh) bf16."""
    BH, S, dh = q.shape
    B = bias.shape[0]
    nH = BH // B
    if Sp != S:
        pad = ((0, 0), (0, Sp - S), (0, 0))
        q, k, v = jnp.pad(q, pad), jnp.pad(k, pad), jnp.pad(v, pad)

    out = pl.pallas_call(
        _flash_attn_kernel,
        out_shape=jax.ShapeDtypeStruct((BH, Sp, dh), jnp.bfloat16),
        grid=(BH, Sp // ts, Sp // ts),
        in_specs=[pl.BlockSpec((1, ts, dh), lambda bh, qi, ki: (bh, qi, 0)),
                  pl.BlockSpec((1, ts, dh), lambda bh, qi, ki: (bh, ki, 0)),
                  pl.BlockSpec((1, ts, dh), lambda bh, qi, ki: (bh, ki, 0)),
                  pl.BlockSpec((1, 1, ts), lambda bh, qi, ki: (bh // nH, 0, ki))],
        out_specs=pl.BlockSpec((1, ts, dh), lambda bh, qi, ki: (bh, qi, 0)),
        scratch_shapes=[pltpu.VMEM((ts, 1), jnp.float32),
                        pltpu.VMEM((ts, 1), jnp.float32),
                        pltpu.VMEM((ts, dh), jnp.float32)],
        compiler_params=pltpu.CompilerParams(
            dimension_semantics=("parallel", "parallel", "arbitrary"),
            vmem_limit_bytes=VMEM_LIMIT),
    )(q, k, v, bias)
    return out[:, :S, :] if Sp != S else out


# ----------------------------- CRF (negative log-likelihood) -----------------------------

def _crf_logz_kernel(em_ref, mask_ref, trans_t_ref, start_ref, end_ref, logz_ref,
                     *, seq_len):
    trans_t = trans_t_ref[...]                    # (Lc, Lc) with trans_t[j, i] = trans[i, j]
    alpha0 = start_ref[...] + em_ref[0]           # (B, Lc); pad labels held at ~NEG

    def body(t, alpha):
        em_t = em_ref[t]                          # (B, Lc)
        m = mask_ref[t]                           # (B, 1)
        # scores[b, j, i] = alpha[b, i] + trans[i, j] + em_t[b, j]; reduce over i (lane axis)
        scores = alpha[:, None, :] + trans_t[None, :, :] + em_t[:, :, None]
        mx = jnp.max(scores, axis=-1)
        nxt = jnp.log(jnp.sum(jnp.exp(scores - mx[:, :, None]), axis=-1)) + mx
        return m * nxt + (1.0 - m) * alpha

    alpha = lax.fori_loop(1, seq_len, body, alpha0)
    fin = alpha + end_ref[...]
    mx = jnp.max(fin, axis=-1, keepdims=True)
    logz_ref[...] = jnp.log(jnp.sum(jnp.exp(fin - mx), axis=-1, keepdims=True)) + mx


def crf_gold_score(emissions, tags, maskf, trans, start, end):
    # TODO(synk): gold-path numerator = tiny gathers; kept in plain JAX per review.
    em_gold = jnp.take_along_axis(emissions, tags[:, :, None], axis=2)[:, :, 0]  # (B,S)
    trans_gold = trans[tags[:, :-1], tags[:, 1:]]                                # (B,S-1)
    start_gold = start[0, tags[:, 0]]
    lengths = jnp.sum(maskf, axis=1).astype(jnp.int32)   # contiguous mask, mask[:,0]==1
    last_tag = jnp.take_along_axis(tags, (lengths - 1)[:, None], axis=1)[:, 0]
    end_gold = end[0, last_tag]
    return (start_gold + em_gold[:, 0]
            + jnp.sum(maskf[:, 1:] * (trans_gold + em_gold[:, 1:]), axis=1)
            + end_gold)


def crf_nll(logits_pad, logits, tags, attention_mask, params):
    B, S, L = logits.shape
    Lc = _round_up(L, 8)                  # label dim padded only to the sublane (8)
    maskf = attention_mask.astype(jnp.float32)
    num = crf_gold_score(logits, tags, maskf, params['crf_trans'],
                         params['crf_start'], params['crf_end'])            # (B,)

    em = logits_pad[:, :, :Lc].transpose(1, 0, 2)                           # (S, B, Lc), pad cols = 0
    mask_t = maskf.T[:, :, None]                                            # (S, B, 1)
    trans_t = _pad2d(params['crf_trans'], Lc, Lc, value=NEG).T              # (Lc, Lc) transposed
    start_p = _pad2d(params['crf_start'], 1, Lc, value=NEG)
    end_p = _pad2d(params['crf_end'], 1, Lc, value=NEG)

    logz = pl.pallas_call(
        functools.partial(_crf_logz_kernel, seq_len=S),
        out_shape=jax.ShapeDtypeStruct((B, 1), jnp.float32),
        grid=(1,),
        in_specs=[pl.BlockSpec((S, B, Lc), lambda i: (0, 0, 0)),
                  pl.BlockSpec((S, B, 1), lambda i: (0, 0, 0)),
                  pl.BlockSpec((Lc, Lc), lambda i: (0, 0)),
                  pl.BlockSpec((1, Lc), lambda i: (0, 0)),
                  pl.BlockSpec((1, Lc), lambda i: (0, 0))],
        out_specs=pl.BlockSpec((B, 1), lambda i: (0, 0)),
        compiler_params=pltpu.CompilerParams(vmem_limit_bytes=VMEM_LIMIT),
    )(em, mask_t, trans_t, start_p, end_p)
    return jnp.sum(logz[:, 0] - num)


# ----------------------------- model glue -----------------------------

def encoder_layer(x, key_bias, lp, *, B, S, H, nH, Sp, ts):
    """x: (B*S, Hp) bf16. key_bias: (B, 1, Sp) f32."""
    Hp = lp['w_qkv'].shape[0]
    dh = H // nH

    qkv = dense(x, lp['w_qkv'], lp['b_qkv'])               # fused Q/K/V: (B*S, 3*Hp) bf16

    def heads(t):
        # TODO(synk): per-head BlockSpec reads would avoid this relayout, but head_dim
        # (< 128) at an arbitrary column offset breaks lane tiling; keep JAX glue (bf16,
        # compact dh, so the traffic is small).
        t = t.reshape(B, S, nH, dh)
        return t.transpose(0, 2, 1, 3).reshape(B * nH, S, dh)

    q = heads(qkv[:, :H])
    k = heads(qkv[:, Hp:Hp + H])
    v = heads(qkv[:, 2 * Hp:2 * Hp + H])

    a = attention(q, k, v, key_bias, Sp=Sp, ts=ts)         # (B*nH, S, dh) bf16
    a = a.reshape(B, nH, S, dh).transpose(0, 2, 1, 3).reshape(B * S, H)   # compact K for wo

    x1 = dense_res_ln(a, lp['wo'], lp['bo'], x, lp['ln1_g'], lp['ln1_b'], true_n=H)
    h = dense(x1, lp['w1'], lp['b1'], activation="gelu")
    x2 = dense_res_ln(h, lp['w2'], lp['b2'], x1, lp['ln2_g'], lp['ln2_b'], true_n=H)
    return x2


def compute_logits(pp, input_ids, attention_mask, *, H, nH):
    B, S = input_ids.shape
    Hp = pp['word_emb'].shape[1]
    # TODO(synk): embedding gather, HF RoBERTa position-id offset and token-type
    # embeddings stay in plain JAX.
    x = pp['word_emb'][input_ids] + pp['pos_emb'][:S][None, :, :]
    x = layernorm(x.reshape(B * S, Hp), pp['emb_ln_g'], pp['emb_ln_b'], true_n=H)

    Sp, ts = _seq_fit(S)
    maskp = jnp.pad(attention_mask.astype(jnp.float32), ((0, 0), (0, Sp - S)))
    key_bias = ((1.0 - maskp) * NEG).reshape(B, 1, Sp)

    for lp in pp['layers']:
        x = encoder_layer(x, key_bias, lp, B=B, S=S, H=H, nH=nH, Sp=Sp, ts=ts)

    logits_pad = dense(x, pp['cls_w'], pp['cls_b'], out_dtype=jnp.float32)  # (B*S, Lp) f32
    return logits_pad.reshape(B, S, -1)


def crf_decode(emissions, mask, trans, start, end):
    # Viterbi decode (plain JAX glue). torchcrf returns List[List[int]]; here a padded
    # (B, S) array is returned: positions past sequence end repeat the last predicted tag.
    B, S, L = emissions.shape
    maskb = mask > 0
    maskf = mask.astype(jnp.float32)
    score = start[0][None, :] + emissions[:, 0]
    ident = jnp.broadcast_to(jnp.arange(L)[None, :], (B, L))
    history = []
    for t in range(1, S):
        sc = score[:, :, None] + trans[None, :, :] + emissions[:, t, None, :]
        best_prev = jnp.argmax(sc, axis=1)
        next_score = jnp.max(sc, axis=1)
        m = maskf[:, t][:, None]
        score = m * next_score + (1.0 - m) * score
        history.append(jnp.where(maskb[:, t][:, None], best_prev, ident))
    score = score + end[0][None, :]
    last_tag = jnp.argmax(score, axis=-1)
    tags = [last_tag]
    for hist in reversed(history):
        last_tag = jnp.take_along_axis(hist, last_tag[:, None], axis=1)[:, 0]
        tags.append(last_tag)
    return jnp.stack(tags[::-1], axis=1)


def roberta_crf_forward(pp, input_ids, attention_mask, labels=None, *, H, nH, L):
    logits_pad = compute_logits(pp, input_ids, attention_mask, H=H, nH=nH)
    logits = logits_pad[:, :, :L]
    if labels is not None:
        tags = jnp.where(labels < 0, 0, labels).astype(jnp.int32)   # labels[labels<0]=0
        loss = crf_nll(logits_pad, logits, tags, attention_mask, pp)
        return {'loss': loss, 'logits': logits}
    # TODO(synk): torchcrf.decode returns variable-length Python lists; a padded (B, S)
    # tag array is returned instead (Viterbi backtracking kept in plain JAX).
    return crf_decode(logits, attention_mask,
                      pp['crf_trans'], pp['crf_start'], pp['crf_end'])


# ----------------------------- deterministic init + padding -----------------------------

def init_params(key, vocab, max_pos, H, nH, F, nlayers, L):
    ks = iter(jax.random.split(key, 64))

    def nrm(shape):
        return jax.random.normal(next(ks), shape, jnp.float32) * 0.02

    def uni(shape):
        return jax.random.uniform(next(ks), shape, jnp.float32, -0.1, 0.1)

    params = {
        'word_emb': nrm((vocab, H)),
        'pos_emb': nrm((max_pos, H)),
        'emb_ln_g': jnp.ones((1, H), jnp.float32),
        'emb_ln_b': jnp.zeros((1, H), jnp.float32),
        'cls_w': nrm((H, L)),
        'cls_b': jnp.zeros((1, L), jnp.float32),
        'crf_trans': uni((L, L)),
        'crf_start': uni((1, L)),
        'crf_end': uni((1, L)),
        'layers': [],
    }
    for _ in range(nlayers):
        params['layers'].append({
            'wq': nrm((H, H)), 'bq': jnp.zeros((1, H), jnp.float32),
            'wk': nrm((H, H)), 'bk': jnp.zeros((1, H), jnp.float32),
            'wv': nrm((H, H)), 'bv': jnp.zeros((1, H), jnp.float32),
            'wo': nrm((H, H)), 'bo': jnp.zeros((1, H), jnp.float32),
            'ln1_g': jnp.ones((1, H), jnp.float32), 'ln1_b': jnp.zeros((1, H), jnp.float32),
            'w1': nrm((H, F)), 'b1': jnp.zeros((1, F), jnp.float32),
            'w2': nrm((F, H)), 'b2': jnp.zeros((1, H), jnp.float32),
            'ln2_g': jnp.ones((1, H), jnp.float32), 'ln2_b': jnp.zeros((1, H), jnp.float32),
        })
    return params


def pad_params(p, H, nH, F, L):
    """Pad weights once to lane-aligned feature dims, pre-cast matmul weights to bf16
    and fold the attention softmax scale into w_q / b_q.  Pads are zero (gamma/beta pads
    zero) so padded activation columns stay exactly zero through the encoder."""
    Hp = _round_up(H, 128)
    Fp = _round_up(F, 128)
    Lp = _round_up(L, 128)
    dh = H // nH
    scale = 1.0 / math.sqrt(dh)

    def bf(a):
        return a.astype(jnp.bfloat16)

    pp = {
        'word_emb': _pad2d(p['word_emb'], p['word_emb'].shape[0], Hp),
        'pos_emb': _pad2d(p['pos_emb'], p['pos_emb'].shape[0], Hp),
        'emb_ln_g': _pad2d(p['emb_ln_g'], 1, Hp),
        'emb_ln_b': _pad2d(p['emb_ln_b'], 1, Hp),
        'cls_w': bf(_pad2d(p['cls_w'], Hp, Lp)),
        'cls_b': _pad2d(p['cls_b'], 1, Lp),
        # true-shape CRF tensors; the CRF kernel pads to a multiple of 8 internally
        'crf_trans': p['crf_trans'], 'crf_start': p['crf_start'], 'crf_end': p['crf_end'],
        'layers': [],
    }
    for lp in p['layers']:
        pp['layers'].append({
            'w_qkv': bf(jnp.concatenate([_pad2d(lp['wq'] * scale, Hp, Hp),
                                         _pad2d(lp['wk'], Hp, Hp),
                                         _pad2d(lp['wv'], Hp, Hp)], axis=1)),
            'b_qkv': jnp.concatenate([_pad2d(lp['bq'] * scale, 1, Hp),
                                      _pad2d(lp['bk'], 1, Hp),
                                      _pad2d(lp['bv'], 1, Hp)], axis=1),
            # wo keeps its K dim compact (= nH*dh) so the attention output needs no pad.
            'wo': bf(_pad2d(lp['wo'], H, Hp)), 'bo': _pad2d(lp['bo'], 1, Hp),
            'ln1_g': _pad2d(lp['ln1_g'], 1, Hp), 'ln1_b': _pad2d(lp['ln1_b'], 1, Hp),
            'w1': bf(_pad2d(lp['w1'], Hp, Fp)), 'b1': _pad2d(lp['b1'], 1, Fp),
            'w2': bf(_pad2d(lp['w2'], Fp, Hp)), 'b2': _pad2d(lp['b2'], 1, Hp),
            'ln2_g': _pad2d(lp['ln2_g'], 1, Hp), 'ln2_b': _pad2d(lp['ln2_b'], 1, Hp),
        })
    return pp


# ----------------------------- main -----------------------------

if __name__ == "__main__":
    B, S, H, nH, F = 2, 8, 32, 2, 64
    V, L, NLAYERS = 100, 5, 2

    key = jax.random.PRNGKey(0)
    pkey, ikey, lkey = jax.random.split(key, 3)

    raw_params = init_params(pkey, V, S, H, nH, F, NLAYERS, L)
    pp = pad_params(raw_params, H, nH, F, L)

    input_ids = jax.random.randint(ikey, (B, S), 0, V, dtype=jnp.int32)
    attention_mask = jnp.array([[1, 1, 1, 1, 1, 1, 1, 1],
                                [1, 1, 1, 1, 1, 1, 0, 0]], dtype=jnp.int32)
    labels = jax.random.randint(lkey, (B, S), 0, L, dtype=jnp.int32)
    labels = labels.at[1, 6:].set(-100)   # HF-style ignored labels on padding

    # training-style call (loss + logits)
    out = roberta_crf_forward(pp, input_ids, attention_mask, labels=labels, H=H, nH=nH, L=L)
    jax.block_until_ready(out['loss'])
    jax.block_until_ready(out['logits'])

    # inference-style call (CRF Viterbi decode)
    preds = roberta_crf_forward(pp, input_ids, attention_mask, labels=None, H=H, nH=nH, L=L)
    jax.block_until_ready(preds)

    print("KERNEL_OK")
</pallas_src>

<mosaic_0001>
module attributes {stable_mosaic.version = 11 : i64} {
  func.func @_layernorm_kernel(%arg0: i32, %arg1: memref<16x128xf32, #tpu.memory_space<vmem>>, %arg2: memref<1x128xf32, #tpu.memory_space<vmem>>, %arg3: memref<1x128xf32, #tpu.memory_space<vmem>>, %arg4: memref<16x128xbf16, #tpu.memory_space<vmem>>) attributes {dimension_semantics = [#tpu.dimension_semantics<parallel>], iteration_bounds = array<i64: 1>, scalar_prefetch = 0 : i64, scratch_operands = 0 : i64, tpu.core_type = #tpu.core_type<tc>, window_params = [{transform_indices = @transform_0, window_bounds = array<i64: 16, 128>}, {pipeline_mode = #tpu.pipeline_mode<synchronous>, transform_indices = @transform_1, window_bounds = array<i64: 1, 128>}, {pipeline_mode = #tpu.pipeline_mode<synchronous>, transform_indices = @transform_2, window_bounds = array<i64: 1, 128>}, {transform_indices = @transform_3, window_bounds = array<i64: 16, 128>}]} {
    %c0 = arith.constant 0 : index
    %c0_0 = arith.constant 0 : index
    %0 = vector.load %arg1[%c0, %c0_0] : memref<16x128xf32, #tpu.memory_space<vmem>>, vector<16x128xf32>
    %c0_1 = arith.constant 0 : index
    %c0_2 = arith.constant 0 : index
    %1 = vector.load %arg2[%c0_1, %c0_2] : memref<1x128xf32, #tpu.memory_space<vmem>>, vector<1x128xf32>
    %c0_3 = arith.constant 0 : index
    %c0_4 = arith.constant 0 : index
    %2 = vector.load %arg3[%c0_3, %c0_4] : memref<1x128xf32, #tpu.memory_space<vmem>>, vector<1x128xf32>
    %cst = arith.constant dense<0.000000e+00> : vector<16xf32>
    %3 = vector.multi_reduction <add>, %0, %cst [1] : vector<16x128xf32> to vector<16xf32>
    %4 = vector.shape_cast %3 : vector<16xf32> to vector<16x1xf32>
    %cst_5 = arith.constant 3.125000e-02 : f32
    %5 = vector.broadcast %cst_5 : f32 to vector<16x1xf32>
    %6 = arith.mulf %4, %5 : vector<16x1xf32>
    %7 = vector.broadcast %6 : vector<16x1xf32> to vector<16x128xf32>
    %8 = arith.subf %0, %7 : vector<16x128xf32>
    %9 = arith.mulf %8, %8 : vector<16x128xf32>
    %cst_6 = arith.constant dense<0.000000e+00> : vector<16xf32>
    %10 = vector.multi_reduction <add>, %9, %cst_6 [1] : vector<16x128xf32> to vector<16xf32>
    %11 = vector.shape_cast %10 : vector<16xf32> to vector<16x1xf32>
    %cst_7 = arith.constant 9.600000e+01 : f32
    %12 = vector.broadcast %cst_7 : f32 to vector<16x1xf32>
    %13 = arith.mulf %12, %6 : vector<16x1xf32>
    %14 = arith.mulf %13, %6 : vector<16x1xf32>
    %15 = arith.subf %11, %14 : vector<16x1xf32>
    %cst_8 = arith.constant 3.125000e-02 : f32
    %16 = vector.broadcast %cst_8 : f32 to vector<16x1xf32>
    %17 = arith.mulf %15, %16 : vector<16x1xf32>
    %cst_9 = arith.constant 9.99999974E-6 : f32
    %18 = vector.broadcast %cst_9 : f32 to vector<16x1xf32>
    %19 = arith.addf %17, %18 : vector<16x1xf32>
    %20 = math.rsqrt %19 : vector<16x1xf32>
    %21 = vector.broadcast %20 : vector<16x1xf32> to vector<16x128xf32>
    %22 = arith.mulf %8, %21 : vector<16x128xf32>
    %23 = vector.broadcast %1 : vector<1x128xf32> to vector<16x128xf32>
    %24 = arith.mulf %22, %23 : vector<16x128xf32>
    %25 = vector.broadcast %2 : vector<1x128xf32> to vector<16x128xf32>
    %26 = arith.addf %24, %25 : vector<16x128xf32>
    %27 = arith.truncf %26 : vector<16x128xf32> to vector<16x128xbf16>
    %c0_10 = arith.constant 0 : index
    %c0_11 = arith.constant 0 : index
    %28 = vector.load %arg4[%c0_10, %c0_11] : memref<16x128xbf16, #tpu.memory_space<vmem>>, vector<16x128xbf16>
    tpu.vector_store %arg4[%c0_10, %c0_11], %27 {strides = array<i32>} : memref<16x128xbf16, #tpu.memory_space<vmem>>, vector<16x128xbf16>,
    return
  }
  func.func @transform_0(%arg0: i32) -> (i32, i32) {
    %c0_i32 = arith.constant 0 : i32
    %c0_i32_0 = arith.constant 0 : i32
    return %arg0, %c0_i32 : i32, i32
  }
  func.func @transform_1(%arg0: i32) -> (i32, i32) {
    %c0_i32 = arith.constant 0 : i32
    %c0_i32_0 = arith.constant 0 : i32
    %c0_i32_1 = arith.constant 0 : i32
    return %c0_i32, %c0_i32_0 : i32, i32
  }
  func.func @transform_2(%arg0: i32) -> (i32, i32) {
    %c0_i32 = arith.constant 0 : i32
    %c0_i32_0 = arith.constant 0 : i32
    %c0_i32_1 = arith.constant 0 : i32
    return %c0_i32, %c0_i32_0 : i32, i32
  }
  func.func @transform_3(%arg0: i32) -> (i32, i32) {
    %c0_i32 = arith.constant 0 : i32
    %c0_i32_0 = arith.constant 0 : i32
    return %arg0, %c0_i32 : i32, i32
  }
}

</mosaic_0001>

<llo_original>
// kernel: tpu_custom_call.1
$region0: #{tpu_custom_call.1}
  #allocation0 [shape = 'u32[]', space=smem, size = 0x4, offset = 0x4, fixed_abs, tag = 'smem constant byte address 0x4 - core index']
  #allocation1 [shape = 'u32[144,128]{1,0:T(1,128)}', space=vmem, size = 0x12000, scoped, tag = 'internal scratch']
  %s0 = inlined_call_operand.hbm [shape: f32[16,128], index: 0, kind: input, shape index: {}]
  %s1 = inlined_call_operand.vmem [shape: f32[1,128], index: 1, kind: input, shape index: {}]
  %s2 = inlined_call_operand.vmem [shape: f32[1,128], index: 2, kind: input, shape index: {}]
  %s3 = inlined_call_operand.hbm [shape: bf16[16,128], index: 3, kind: output, shape index: {}]
  %s4 = sld [smem:[#allocation0]]
  $region26: #{tpu_custom_call.1} parent=0
    _
  %s6 = ssub.s32 1, %s4
  %s7 = scalar_select 0, %s6, %s4
  $region1: #{tpu_custom_call.1} parent=0
    #allocation2 [shape = 'u8[8192]{0}', space=vmem, size = 0x2000, scoped, tag = 'input window, operand 0, single buffered']
    #allocation3 [shape = 's32[1]{0}', space=sflag, size = 0x4, scoped, tag = 'scoped memory for tpu_custom_call.1']
    #allocation4 [shape = 's32[1]{0}', space=sflag, size = 0x4, scoped, tag = 'scoped memory for tpu_custom_call.1']
    #allocation5 [shape = 'u8[4096]{0}', space=vmem, size = 0x1000, scoped, tag = 'output window, operand 0, single buffered']
    %8 = vsyncpa [#allocation3], 0
    %9 = vsyncpa [#allocation4], 0
    // Predicated region
    $region2: #{tpu_custom_call.1} parent=1 // pred_check
      _
    $region3: #{tpu_custom_call.1} parent=1 // pred_check_branch
      %11 = sbr.rel (0) target = $region5
    $region4: #{tpu_custom_call.1} parent=1 // pred_region
      %s13 = ssub.s32 256, 256
      %14 = vsyncadd [#allocation3], %s13
      %s15 = sshll.u32 [#allocation2], 4
      %s16 = int_to_ptr.vmem [resolvable:$true] %s15
      %21 = dma.hbm_to_vmem [thread:$0]  %s0, 256, %s16, [#allocation3], 128, 128, 8
    $region5: #{tpu_custom_call.1} parent=1 // pred_fallthru
      _
    // Predicated region
    $region6: #{tpu_custom_call.1} parent=1 // pred_check
      _
    $region7: #{tpu_custom_call.1} parent=1 // pred_check_branch
      %23 = sbr.rel (0) target = $region9
    $region8: #{tpu_custom_call.1} parent=1 // pred_region
      _
    $region9: #{tpu_custom_call.1} parent=1 // pred_fallthru
      _
    // Predicated region
    $region10: #{tpu_custom_call.1} parent=1 // pred_check
      _
    $region11: #{tpu_custom_call.1} parent=1 // pred_check_branch
      %25 = sbr.rel (0) target = $region13
    $region12: #{tpu_custom_call.1} parent=1 // pred_region
      _
    $region13: #{tpu_custom_call.1} parent=1 // pred_fallthru
      _
    // Predicated region
    $region14: #{tpu_custom_call.1} parent=1 // pred_check
      _
    $region15: #{tpu_custom_call.1} parent=1 // pred_check_branch
      %27 = sbr.rel (0) target = $region17
    $region16: #{tpu_custom_call.1} parent=1 // pred_region
      %28 = dma.done [#allocation3], 256
    $region17: #{tpu_custom_call.1} parent=1 // pred_fallthru
      _
    %v29 = vld [vmem:[#allocation2] sm:$0xff]
    %v30 = vld [vmem:[#allocation2 + $0x8] sm:$0xff]
    %v31 = vld [vmem:[%s1] sm:$0x1]
    %v32 = vld [vmem:[%s2] sm:$0x1]
    %33 = vadd.xlane.f32.xlu0 %v29
    %v34 = vpop.xlane.xlu0 %33
    %35 = vadd.xlane.f32.xlu0 %v30
    %v36 = vpop.xlane.xlu0 %35
    %v37 = vmul.f32 %v34, 0.03125
    %v38 = vmul.f32 %v36, 0.03125
    %v39 = vsub.f32 %v29, %v37
    %v40 = vsub.f32 %v30, %v38
    %v41 = vmul.f32 %v39, %v39
    %v42 = vmul.f32 %v40, %v40
    %43 = vadd.xlane.f32.xlu0 %v41
    %v44 = vpop.xlane.xlu0 %43
    %45 = vadd.xlane.f32.xlu0 %v42
    %v46 = vpop.xlane.xlu0 %45
    %v47 = vmul.f32 %v37, 96.0
    %v48 = vmul.f32 %v38, 96.0
    %v49 = vmul.f32 %v47, %v37
    %v50 = vmul.f32 %v48, %v38
    %v51 = vsub.f32 %v44, %v49
    %v52 = vsub.f32 %v46, %v50
    %v53 = vmul.f32 %v51, 0.03125
    %v54 = vmul.f32 %v52, 0.03125
    %v55 = vadd.f32 %v53, 1e-05
    %v56 = vadd.f32 %v54, 1e-05
    %v57 = vrsqrt.pop %v55
    %v58 = vrsqrt.pop %v56
    %v59 = vmul.f32 %v39, %v57
    %v60 = vmul.f32 %v40, %v58
    %v62 = vlaneseq
    %v63 = vshrl.u32 %v62, 7
    %v64 = vsub.s32 0, %v63
    %v65 = vrot.slane %v31, %v64
    %v67 = vmul.f32 %v59, %v65
    %v68 = vmul.f32 %v60, %v65
    %v70 = vlaneseq
    %v71 = vshrl.u32 %v70, 7
    %v72 = vsub.s32 0, %v71
    %v73 = vrot.slane %v32, %v72
    %v75 = vadd.f32 %v67, %v73
    %v76 = vadd.f32 %v68, %v73
    %v77 = vpack.c.bf16 %v76, %v75
    %v79 = vunpack.c.l.b16 %v77
    %v80 = vunpack.c.h.b16 %v77
    %v81 = vpack.c.b16 %v79, %v79
    %v82 = vpack.c.b16 %v80, %v80
    %85 = vst [vmem:[#allocation5] sm:$0xf] %v81
    %86 = vst [vmem:[#allocation5 + $0x4] sm:$0xf] %v82
    // Predicated region
    $region18: #{tpu_custom_call.1} parent=1 // pred_check
      _
    $region19: #{tpu_custom_call.1} parent=1 // pred_check_branch
      %88 = sbr.rel (0) target = $region21
    $region20: #{tpu_custom_call.1} parent=1 // pred_region
      %s90 = ssub.s32 128, 128
      %91 = vsyncadd [#allocation4], %s90
      %s92 = sshll.u32 [#allocation5], 4
      %s93 = int_to_ptr.vmem [resolvable:$true] %s92
      %98 = dma.vmem_to_hbm [thread:$0]  %s93, 128, %s3, [#allocation4], 64, 64, 4
    $region21: #{tpu_custom_call.1} parent=1 // pred_fallthru
      _
    // Predicated region
    $region22: #{tpu_custom_call.1} parent=1 // pred_check
      _
    $region23: #{tpu_custom_call.1} parent=1 // pred_check_branch
      %100 = sbr.rel (0) target = $region25
    $region24: #{tpu_custom_call.1} parent=1 // pred_region
      %101 = dma.done [#allocation4], 128
    $region25: #{tpu_custom_call.1} parent=1 // pred_fallthru
      _
    %102 = vsyncpa [#allocation3], 1
    %103 = vsyncpa [#allocation4], 1

</llo_original>
